<compile_context>
chip_gen: v5e
topology: v5e:2x2
jax: 0.10.0
libtpu: 0.0.40
codegen_flags: <defaults>
</compile_context>

<pallas_src>
import functools

import jax
import jax.numpy as jnp
from jax.experimental import pallas as pl
from jax.experimental.pallas import tpu as pltpu


def _round_up(x: int, m: int) -> int:
    return ((x + m - 1) // m) * m


def _vmem_capacity_bytes() -> int:
    """Per-core VMEM capacity; conservative fallback if the query fails."""
    try:
        info = pltpu.get_tpu_info()
        cap = getattr(info, "vmem_capacity_bytes", None)
        if cap:
            return int(cap)
    except Exception:
        pass
    return 64 << 20  # assume the smallest (v7x) if we cannot tell


def _num_tensorcores_per_chip() -> int:
    try:
        kind = jax.devices()[0].device_kind.lower()
    except Exception:
        return 1
    return 2 if "v7" in kind else 1


def _vmem_need_bytes(TB: int, Np: int, D: int, Hp: int, itemsize: int = 4) -> int:
    """Approximate live-VMEM footprint for one grid step (incl. double buffers)."""
    Dp = _round_up(D, 128)                       # x tile is lane-padded to 128
    x_tile = TB * Np * Dp * itemsize             # one (TB, Np, D) input tile
    h_live = TB * Np * Hp * itemsize             # attention-MLP hidden activations
    prod = TB * Np * Dp * itemsize               # x * attn broadcast product
    small = 8 * TB * 128 * itemsize + 2 * TB * Hp * itemsize   # scores/attn/hc/...
    weights = 2 * (2 * _round_up(D, 8) * Hp + 4 * 8 * Hp) * itemsize  # dbl-buffered
    return 2 * x_tile + x_tile + h_live + prod + small + weights


def attention_aggregator_kernel(
    x_ref,      # (TB, Np, D)  frame-feature batch tile (VMEM)
    aw1_ref,    # (D, Hp)      attention Linear1 weight (lane-padded)
    ab1_ref,    # (1, Hp)      attention Linear1 bias
    aw2_ref,    # (1, Hp)      attention Linear2 weight as a row vector
    cw1_ref,    # (D, Hp)      classifier Linear1 weight
    cb1_ref,    # (1, Hp)      classifier Linear1 bias
    cw2_ref,    # (1, Hp)      classifier Linear2 weight as a row vector
    cb2_ref,    # (1,) SMEM    classifier Linear2 bias (scalar)
    out_ref,    # (TB, 1)      prediction tile
    *,
    n_valid: int,   # real number of frames (<= Np); padded frames are masked
):
    TB, Np, D = x_ref.shape
    Hp = aw1_ref.shape[1]

    x = x_ref[...]                                   # (TB, Np, D) f32

    # ---------------- attention MLP: Linear -> ReLU -> Linear(·,1) ----------
    # Np is a multiple of 8 (wrapper pads frames), so this reshape is a free
    # sublane-aligned view; the matmul is one big (TB*Np, D) @ (D, Hp).
    x2 = x.reshape(TB * Np, D)
    h = jnp.dot(x2, aw1_ref[...], preferred_element_type=jnp.float32) + ab1_ref[...]
    h = jnp.maximum(h, 0.0)                          # (TB*Np, Hp)

    # Width-1 head as VPU multiply + XLU lane reduce (no degenerate MXU matmul).
    # ab2 is omitted: softmax over frames is invariant to a per-row constant.
    s = jnp.sum(h.reshape(TB, Np, Hp) * aw2_ref[...], axis=-1)   # (TB, Np)

    # Mask padded frames (if any) so they receive zero attention weight.
    if n_valid < Np:
        frame_idx = jax.lax.broadcasted_iota(jnp.int32, (TB, Np), 1)
        s = jnp.where(frame_idx < n_valid, s, -jnp.inf)

    # Softmax over the frame dimension (torch Softmax(dim=1) on (B, N, 1)).
    m = jnp.max(s, axis=-1, keepdims=True)
    e = jnp.exp(s - m)                               # (TB, Np), padded cols -> 0
    inv_denom = 1.0 / jnp.sum(e, axis=-1, keepdims=True)   # exact, (TB, 1) only

    # ---------------- weighted aggregation over frames -----------------------
    # Normalization is deferred to the (TB, D) aggregate (linear in attn), so
    # the broadcast divide over (TB, Np, D) is avoided.
    agg = jnp.sum(x * e[:, :, None], axis=1) * inv_denom     # (TB, D)

    # ------- classifier: Linear -> ReLU -> (Dropout = id in eval) -> Linear --
    hc = jnp.dot(agg, cw1_ref[...], preferred_element_type=jnp.float32) + cb1_ref[...]
    hc = jnp.maximum(hc, 0.0)                        # (TB, Hp)
    pred = jnp.sum(hc * cw2_ref[...], axis=-1, keepdims=True) + cb2_ref[0]
    # NOTE: the (TB, 1) store is lane-sparse (TB/8 masked vst), but it is only
    # TB*4 bytes per step; a lane-dense relayout would cost an XLU transpose
    # for negligible gain.  Treated as a polish item per the perf review.
    out_ref[...] = pred.astype(out_ref.dtype)


def attention_aggregator(x, params):
    """x: (B, N, D) float32; params: the 8 nn.Linear weights/biases. Returns (B, 1)."""
    aw1, ab1, aw2, ab2, cw1, cb1, cw2, cb2 = params
    del ab2  # softmax over frames is invariant to this constant; dropped in-kernel
    B, N, D = x.shape
    H = aw1.shape[1]
    Hp = _round_up(H, 128)        # lane-align the hidden dim for full MXU columns
    ph = Hp - H

    # Zero-padded hidden units are exact no-ops: ReLU(0*x + 0) = 0 and the
    # corresponding head weight is 0, so results are unchanged.
    aw1p = jnp.pad(aw1, ((0, 0), (0, ph)))
    ab1p = jnp.pad(ab1, ((0, 0), (0, ph)))
    aw2t = jnp.pad(aw2.reshape(1, H), ((0, 0), (0, ph)))   # (1, Hp) row vector
    cw1p = jnp.pad(cw1, ((0, 0), (0, ph)))
    cb1p = jnp.pad(cb1, ((0, 0), (0, ph)))
    cw2t = jnp.pad(cw2.reshape(1, H), ((0, 0), (0, ph)))
    cb2v = cb2.reshape(1)                                   # scalar, lives in SMEM

    # Sublane-align the frame axis so the in-kernel (TB*Np, D) reshape is a
    # free view; padded frames are masked to -inf before the softmax (exact).
    Np = _round_up(N, 8)
    if Np != N:
        x = jnp.pad(x, ((0, 0), (0, Np - N), (0, 0)))

    # ---- generation-aware batch-tile sizing --------------------------------
    vmem_cap = _vmem_capacity_bytes()
    budget = min((vmem_cap * 3) // 8, 48 << 20)   # ~24 MiB on v7x, 48 MiB on v5e/v6e
    TB = min(1024, _round_up(B, 8))
    while TB > 8 and _vmem_need_bytes(TB, Np, D, Hp, x.dtype.itemsize) > budget:
        TB = max(8, _round_up(TB // 2, 8))

    num_cores = _num_tensorcores_per_chip()
    if num_cores > 1 and B > 8:
        # Keep at least one batch tile per TensorCore so CORE_PARALLEL has
        # work to split across both v7x cores.
        TB = min(TB, _round_up(pl.cdiv(B, num_cores), 8))

    nb = pl.cdiv(B, TB)
    B_pad = nb * TB
    if B_pad != B:
        x = jnp.pad(x, ((0, B_pad - B), (0, 0), (0, 0)))

    dim_sems = (pltpu.CORE_PARALLEL,) if (num_cores > 1 and nb >= 2) else ("parallel",)
    # Raise the scoped-VMEM limit above v5e's 16 MiB / v6e's 32 MiB defaults
    # while staying well inside physical capacity (64 MiB on v7x).
    vmem_limit = int(min(vmem_cap - (2 << 20), budget + (8 << 20)))

    # TODO(synk): optional bf16 x streaming (halves the HBM-bound x traffic)
    # and pl.Buffered sweeps on the weight/x specs are left as opt-in tuning.
    wmap = lambda b: (0, 0)   # weights: DMA'd once, stay resident across the grid
    kernel = functools.partial(attention_aggregator_kernel, n_valid=N)
    out = pl.pallas_call(
        kernel,
        out_shape=jax.ShapeDtypeStruct((B_pad, 1), jnp.float32),
        grid=(nb,),
        in_specs=[
            pl.BlockSpec((TB, Np, D), lambda b: (b, 0, 0)),   # streamed x tiles
            pl.BlockSpec((D, Hp), wmap),
            pl.BlockSpec((1, Hp), wmap),
            pl.BlockSpec((1, Hp), wmap),
            pl.BlockSpec((D, Hp), wmap),
            pl.BlockSpec((1, Hp), wmap),
            pl.BlockSpec((1, Hp), wmap),
            pl.BlockSpec(memory_space=pltpu.MemorySpace.SMEM),
        ],
        out_specs=pl.BlockSpec((TB, 1), lambda b: (b, 0)),
        compiler_params=pltpu.CompilerParams(
            dimension_semantics=dim_sems,
            vmem_limit_bytes=vmem_limit,
        ),
    )(x, aw1p, ab1p, aw2t, cw1p, cb1p, cw2t, cb2v)
    return out[:B]


def init_params(key, feature_dim):
    """Deterministic init mirroring nn.Linear shapes (uniform +-1/sqrt(fan_in))."""
    H = feature_dim // 2
    ks = jax.random.split(key, 8)
    s_in = 1.0 / jnp.sqrt(feature_dim)
    s_h = 1.0 / jnp.sqrt(H)
    aw1 = jax.random.uniform(ks[0], (feature_dim, H), jnp.float32, -s_in, s_in)
    ab1 = jax.random.uniform(ks[1], (1, H), jnp.float32, -s_in, s_in)
    aw2 = jax.random.uniform(ks[2], (H, 1), jnp.float32, -s_h, s_h)
    ab2 = jax.random.uniform(ks[3], (1, 1), jnp.float32, -s_h, s_h)
    cw1 = jax.random.uniform(ks[4], (feature_dim, H), jnp.float32, -s_in, s_in)
    cb1 = jax.random.uniform(ks[5], (1, H), jnp.float32, -s_in, s_in)
    cw2 = jax.random.uniform(ks[6], (H, 1), jnp.float32, -s_h, s_h)
    cb2 = jax.random.uniform(ks[7], (1, 1), jnp.float32, -s_h, s_h)
    return (aw1, ab1, aw2, ab2, cw1, cb1, cw2, cb2)


def reference(x, params):
    """Pure-JAX reference of the PyTorch forward (eval mode)."""
    aw1, ab1, aw2, ab2, cw1, cb1, cw2, cb2 = params
    hp = jax.lax.Precision.HIGHEST
    h = jax.nn.relu(jnp.einsum('bnd,dh->bnh', x, aw1, precision=hp) + ab1)
    s = jnp.einsum('bnh,ho->bno', h, aw2, precision=hp) + ab2   # (B, N, 1)
    w = jax.nn.softmax(s, axis=1)                               # softmax over frames
    agg = jnp.sum(x * w, axis=1)                                # (B, D)
    hc = jax.nn.relu(jnp.einsum('bd,dh->bh', agg, cw1, precision=hp) + cb1)
    return jnp.einsum('bh,ho->bo', hc, cw2, precision=hp) + cb2  # (B, 1)


def _check(B, N, D, key):
    kx, kp = jax.random.split(key)
    x = jax.random.normal(kx, (B, N, D), dtype=jnp.float32)
    params = init_params(kp, D)
    out = jax.block_until_ready(attention_aggregator(x, params))
    ref = reference(x, params)
    assert out.shape == (B, 1), out.shape
    assert jnp.allclose(out, ref, atol=1e-3, rtol=1e-3), (out, ref)


if __name__ == "__main__":
    # Module-default shape: batch=2, num_frames=5, feature_dim=32
    # (exercises the frame-padding + -inf masking path, N=5 -> Np=8).
    _check(B=2, N=5, D=32, key=jax.random.PRNGKey(0))
    # Single large tile (TB covers the whole batch, resident weights).
    _check(B=300, N=8, D=64, key=jax.random.PRNGKey(1))
    # Multi-tile grid path with batch padding (nb >= 2 even at TB=1024).
    _check(B=2100, N=8, D=64, key=jax.random.PRNGKey(2))
    print("KERNEL_OK")
</pallas_src>

<mosaic_0001>
module attributes {stable_mosaic.version = 11 : i64} {
  func.func @attention_aggregator_kernel(%arg0: i32, %arg1: memref<8x8x32xf32, #tpu.memory_space<vmem>>, %arg2: memref<32x128xf32, #tpu.memory_space<vmem>>, %arg3: memref<1x128xf32, #tpu.memory_space<vmem>>, %arg4: memref<1x128xf32, #tpu.memory_space<vmem>>, %arg5: memref<32x128xf32, #tpu.memory_space<vmem>>, %arg6: memref<1x128xf32, #tpu.memory_space<vmem>>, %arg7: memref<1x128xf32, #tpu.memory_space<vmem>>, %arg8: memref<1xf32, #tpu.memory_space<smem>>, %arg9: memref<8x1xf32, #tpu.memory_space<vmem>>) attributes {dimension_semantics = [#tpu.dimension_semantics<parallel>], iteration_bounds = array<i64: 1>, scalar_prefetch = 0 : i64, scratch_operands = 0 : i64, tpu.core_type = #tpu.core_type<tc>, window_params = [{transform_indices = @transform_0, window_bounds = array<i64: 8, 8, 32>}, {pipeline_mode = #tpu.pipeline_mode<synchronous>, transform_indices = @transform_1, window_bounds = array<i64: 32, 128>}, {pipeline_mode = #tpu.pipeline_mode<synchronous>, transform_indices = @transform_2, window_bounds = array<i64: 1, 128>}, {pipeline_mode = #tpu.pipeline_mode<synchronous>, transform_indices = @transform_3, window_bounds = array<i64: 1, 128>}, {pipeline_mode = #tpu.pipeline_mode<synchronous>, transform_indices = @transform_4, window_bounds = array<i64: 32, 128>}, {pipeline_mode = #tpu.pipeline_mode<synchronous>, transform_indices = @transform_5, window_bounds = array<i64: 1, 128>}, {pipeline_mode = #tpu.pipeline_mode<synchronous>, transform_indices = @transform_6, window_bounds = array<i64: 1, 128>}, {transform_indices = @transform_7, window_bounds = array<i64: 1>}, {transform_indices = @transform_8, window_bounds = array<i64: 8, 1>}]} {
    %c0 = arith.constant 0 : index
    %c0_0 = arith.constant 0 : index
    %c0_1 = arith.constant 0 : index
    %0 = vector.load %arg1[%c0, %c0_0, %c0_1] : memref<8x8x32xf32, #tpu.memory_space<vmem>>, vector<8x8x32xf32>
    %1 = vector.shape_cast %0 : vector<8x8x32xf32> to vector<64x32xf32>
    %c0_2 = arith.constant 0 : index
    %c0_3 = arith.constant 0 : index
    %2 = vector.load %arg2[%c0_2, %c0_3] : memref<32x128xf32, #tpu.memory_space<vmem>>, vector<32x128xf32>
    %cst = arith.constant dense<0.000000e+00> : vector<64x128xf32>
    %3 = tpu.matmul %1, %2, %cst {dimension_numbers = #tpu.dot_dimension_numbers<[1], [0], [0], [1], [0, 0, 1, 1], [], []>} : vector<64x32xf32>, vector<32x128xf32>, vector<64x128xf32> -> vector<64x128xf32>
    %c0_4 = arith.constant 0 : index
    %c0_5 = arith.constant 0 : index
    %4 = vector.load %arg3[%c0_4, %c0_5] : memref<1x128xf32, #tpu.memory_space<vmem>>, vector<1x128xf32>
    %5 = vector.broadcast %4 : vector<1x128xf32> to vector<64x128xf32>
    %6 = arith.addf %3, %5 : vector<64x128xf32>
    %cst_6 = arith.constant 0.000000e+00 : f32
    %7 = vector.broadcast %cst_6 : f32 to vector<64x128xf32>
    %8 = arith.maximumf %6, %7 : vector<64x128xf32>
    %9 = vector.shape_cast %8 : vector<64x128xf32> to vector<8x8x128xf32>
    %c0_7 = arith.constant 0 : index
    %c0_8 = arith.constant 0 : index
    %10 = vector.load %arg4[%c0_7, %c0_8] : memref<1x128xf32, #tpu.memory_space<vmem>>, vector<1x128xf32>
    %11 = vector.shape_cast %10 : vector<1x128xf32> to vector<1x1x128xf32>
    %12 = vector.broadcast %11 : vector<1x1x128xf32> to vector<8x8x128xf32>
    %13 = arith.mulf %9, %12 : vector<8x8x128xf32>
    %cst_9 = arith.constant dense<0.000000e+00> : vector<8x8xf32>
    %14 = vector.multi_reduction <add>, %13, %cst_9 [2] : vector<8x8x128xf32> to vector<8x8xf32>
    %15 = tpu.iota {dimensions = array<i32: 1>} : vector<8x8xi32>
    %c5_i32 = arith.constant 5 : i32
    %16 = vector.broadcast %c5_i32 : i32 to vector<8x8xi32>
    %17 = arith.cmpi slt, %15, %16 : vector<8x8xi32>
    %cst_10 = arith.constant 0xFF800000 : f32
    %18 = vector.broadcast %cst_10 : f32 to vector<8x8xf32>
    %19 = arith.select %17, %14, %18 : vector<8x8xi1>, vector<8x8xf32>
    %cst_11 = arith.constant dense<0xFF800000> : vector<8xf32>
    %20 = vector.multi_reduction <maximumf>, %19, %cst_11 [1] : vector<8x8xf32> to vector<8xf32>
    %21 = vector.shape_cast %20 : vector<8xf32> to vector<8x1xf32>
    %22 = vector.broadcast %21 : vector<8x1xf32> to vector<8x8xf32>
    %23 = arith.subf %19, %22 : vector<8x8xf32>
    %24 = math.exp %23 : vector<8x8xf32>
    %cst_12 = arith.constant dense<0.000000e+00> : vector<8xf32>
    %25 = vector.multi_reduction <add>, %24, %cst_12 [1] : vector<8x8xf32> to vector<8xf32>
    %26 = vector.shape_cast %25 : vector<8xf32> to vector<8x1xf32>
    %cst_13 = arith.constant 1.000000e+00 : f32
    %27 = vector.broadcast %cst_13 : f32 to vector<8x1xf32>
    %28 = arith.divf %27, %26 : vector<8x1xf32>
    %29 = vector.shape_cast %24 : vector<8x8xf32> to vector<8x8x1xf32>
    %30 = vector.broadcast %29 : vector<8x8x1xf32> to vector<8x8x32xf32>
    %31 = arith.mulf %0, %30 : vector<8x8x32xf32>
    %cst_14 = arith.constant dense<0.000000e+00> : vector<8x32xf32>
    %32 = vector.multi_reduction <add>, %31, %cst_14 [1] : vector<8x8x32xf32> to vector<8x32xf32>
    %33 = vector.broadcast %28 : vector<8x1xf32> to vector<8x32xf32>
    %34 = arith.mulf %32, %33 : vector<8x32xf32>
    %c0_15 = arith.constant 0 : index
    %c0_16 = arith.constant 0 : index
    %35 = vector.load %arg5[%c0_15, %c0_16] : memref<32x128xf32, #tpu.memory_space<vmem>>, vector<32x128xf32>
    %cst_17 = arith.constant dense<0.000000e+00> : vector<8x128xf32>
    %36 = tpu.matmul %34, %35, %cst_17 {dimension_numbers = #tpu.dot_dimension_numbers<[1], [0], [0], [1], [0, 0, 1, 1], [], []>} : vector<8x32xf32>, vector<32x128xf32>, vector<8x128xf32> -> vector<8x128xf32>
    %c0_18 = arith.constant 0 : index
    %c0_19 = arith.constant 0 : index
    %37 = vector.load %arg6[%c0_18, %c0_19] : memref<1x128xf32, #tpu.memory_space<vmem>>, vector<1x128xf32>
    %38 = vector.broadcast %37 : vector<1x128xf32> to vector<8x128xf32>
    %39 = arith.addf %36, %38 : vector<8x128xf32>
    %cst_20 = arith.constant 0.000000e+00 : f32
    %40 = vector.broadcast %cst_20 : f32 to vector<8x128xf32>
    %41 = arith.maximumf %39, %40 : vector<8x128xf32>
    %c0_21 = arith.constant 0 : index
    %c0_22 = arith.constant 0 : index
    %42 = vector.load %arg7[%c0_21, %c0_22] : memref<1x128xf32, #tpu.memory_space<vmem>>, vector<1x128xf32>
    %43 = vector.broadcast %42 : vector<1x128xf32> to vector<8x128xf32>
    %44 = arith.mulf %41, %43 : vector<8x128xf32>
    %cst_23 = arith.constant dense<0.000000e+00> : vector<8xf32>
    %45 = vector.multi_reduction <add>, %44, %cst_23 [1] : vector<8x128xf32> to vector<8xf32>
    %46 = vector.shape_cast %45 : vector<8xf32> to vector<8x1xf32>
    %c0_24 = arith.constant 0 : index
    %47 = memref.load %arg8[%c0_24] : memref<1xf32, #tpu.memory_space<smem>>
    %48 = vector.broadcast %47 : f32 to vector<8x1xf32>
    %49 = arith.addf %46, %48 : vector<8x1xf32>
    %c0_25 = arith.constant 0 : index
    %c0_26 = arith.constant 0 : index
    %50 = vector.load %arg9[%c0_25, %c0_26] : memref<8x1xf32, #tpu.memory_space<vmem>>, vector<8x1xf32>
    tpu.vector_store %arg9[%c0_25, %c0_26], %49 {strides = array<i32>} : memref<8x1xf32, #tpu.memory_space<vmem>>, vector<8x1xf32>,
    return
  }
  func.func @transform_0(%arg0: i32) -> (i32, i32, i32) {
    %c0_i32 = arith.constant 0 : i32
    %c0_i32_0 = arith.constant 0 : i32
    %c0_i32_1 = arith.constant 0 : i32
    return %arg0, %c0_i32, %c0_i32_0 : i32, i32, i32
  }
  func.func @transform_1(%arg0: i32) -> (i32, i32) {
    %c0_i32 = arith.constant 0 : i32
    %c0_i32_0 = arith.constant 0 : i32
    %c0_i32_1 = arith.constant 0 : i32
    return %c0_i32, %c0_i32_0 : i32, i32
  }
  func.func @transform_2(%arg0: i32) -> (i32, i32) {
    %c0_i32 = arith.constant 0 : i32
    %c0_i32_0 = arith.constant 0 : i32
    %c0_i32_1 = arith.constant 0 : i32
    return %c0_i32, %c0_i32_0 : i32, i32
  }
  func.func @transform_3(%arg0: i32) -> (i32, i32) {
    %c0_i32 = arith.constant 0 : i32
    %c0_i32_0 = arith.constant 0 : i32
    %c0_i32_1 = arith.constant 0 : i32
    return %c0_i32, %c0_i32_0 : i32, i32
  }
  func.func @transform_4(%arg0: i32) -> (i32, i32) {
    %c0_i32 = arith.constant 0 : i32
    %c0_i32_0 = arith.constant 0 : i32
    %c0_i32_1 = arith.constant 0 : i32
    return %c0_i32, %c0_i32_0 : i32, i32
  }
  func.func @transform_5(%arg0: i32) -> (i32, i32) {
    %c0_i32 = arith.constant 0 : i32
    %c0_i32_0 = arith.constant 0 : i32
    %c0_i32_1 = arith.constant 0 : i32
    return %c0_i32, %c0_i32_0 : i32, i32
  }
  func.func @transform_6(%arg0: i32) -> (i32, i32) {
    %c0_i32 = arith.constant 0 : i32
    %c0_i32_0 = arith.constant 0 : i32
    %c0_i32_1 = arith.constant 0 : i32
    return %c0_i32, %c0_i32_0 : i32, i32
  }
  func.func @transform_7(%arg0: i32) -> i32 {
    %c0_i32 = arith.constant 0 : i32
    %c0_i32_0 = arith.constant 0 : i32
    return %c0_i32 : i32
  }
  func.func @transform_8(%arg0: i32) -> (i32, i32) {
    %c0_i32 = arith.constant 0 : i32
    %c0_i32_0 = arith.constant 0 : i32
    return %arg0, %c0_i32 : i32, i32
  }
}

</mosaic_0001>

<llo_original>
// kernel: tpu_custom_call.1
$region0: #{tpu_custom_call.1}
  #allocation0 [shape = 'u32[]', space=smem, size = 0x4, offset = 0x4, fixed_abs, tag = 'smem constant byte address 0x4 - core index']
  #allocation1 [shape = 'u32[72,128]{1,0:T(1,128)}', space=vmem, size = 0x9000, scoped, tag = 'internal scratch']
  #allocation2 [shape = 'f32[1]{0:T(128)S(6)}', space=smem, size = 0x200, scoped, tag = 'scoped memory for tpu_custom_call.1']
  %s0 = inlined_call_operand.hbm [shape: f32[8,8,32], index: 0, kind: input, shape index: {}]
  %s1 = inlined_call_operand.hbm [shape: f32[32,128], index: 1, kind: input, shape index: {}]
  %s2 = inlined_call_operand.vmem [shape: f32[1,128], index: 2, kind: input, shape index: {}]
  %s3 = inlined_call_operand.vmem [shape: f32[1,128], index: 3, kind: input, shape index: {}]
  %s4 = inlined_call_operand.hbm [shape: f32[32,128], index: 4, kind: input, shape index: {}]
  %s5 = inlined_call_operand.vmem [shape: f32[1,128], index: 5, kind: input, shape index: {}]
  %s6 = inlined_call_operand.vmem [shape: f32[1,128], index: 6, kind: input, shape index: {}]
  %s7 = inlined_call_operand.<no memory space> [shape: f32[1], index: 7, kind: input, shape index: {}]
  %s8 = inlined_call_operand.vmem [shape: f32[8,1], index: 8, kind: output, shape index: {}]
  %s9 = sld [smem:[#allocation0]]
  $region54: #{tpu_custom_call.1} parent=0
    _
  %s11 = ssub.s32 1, %s9
  %s12 = scalar_select 0, %s11, %s9
  %13 = sst [smem:[#allocation2]] %s7
  $region1: #{tpu_custom_call.1} parent=0
    #allocation3 [shape = 'u8[32768]{0}', space=vmem, size = 0x8000, scoped, tag = 'input window, operand 0, single buffered']
    #allocation4 [shape = 's32[1]{0}', space=sflag, size = 0x4, scoped, tag = 'scoped memory for tpu_custom_call.1']
    #allocation5 [shape = 'u8[16384]{0}', space=vmem, size = 0x4000, scoped, tag = 'input window, operand 1, single buffered']
    #allocation6 [shape = 's32[1]{0}', space=sflag, size = 0x4, scoped, tag = 'scoped memory for tpu_custom_call.1']
    #allocation7 [shape = 'u8[16384]{0}', space=vmem, size = 0x4000, scoped, tag = 'input window, operand 4, single buffered']
    %14 = vsyncpa [#allocation4], 0
    %15 = vsyncpa [#allocation6], 0
    // Predicated region
    $region2: #{tpu_custom_call.1} parent=1 // pred_check
      _
    $region3: #{tpu_custom_call.1} parent=1 // pred_check_branch
      %17 = sbr.rel (0) target = $region5
    $region4: #{tpu_custom_call.1} parent=1 // pred_region
      %19 = vsyncadd [#allocation4], 0
      %s20 = sshll.u32 %s0, 4
      %s21 = int_to_ptr.hbm [resolvable:$true] %s20
      %s22 = sshll.u32 [#allocation3], 4
      %s23 = int_to_ptr.vmem [resolvable:$true] %s22
      %28 = dma.hbm_to_vmem [thread:$0]  %s21, 1024, %s23, [#allocation4], 128, 128, 8
    $region5: #{tpu_custom_call.1} parent=1 // pred_fallthru
      _
    // Predicated region
    $region6: #{tpu_custom_call.1} parent=1 // pred_check
      _
    $region7: #{tpu_custom_call.1} parent=1 // pred_check_branch
      %30 = sbr.rel (0) target = $region9
    $region8: #{tpu_custom_call.1} parent=1 // pred_region
      %32 = vsyncadd [#allocation6], 0
      %s33 = sshll.u32 %s1, 4
      %s34 = int_to_ptr.hbm [resolvable:$true] %s33
      %s35 = sshll.u32 [#allocation5], 4
      %s36 = int_to_ptr.vmem [resolvable:$true] %s35
      %41 = dma.hbm_to_vmem [thread:$0]  %s34, 512, %s36, [#allocation6], 128, 128, 8
    $region9: #{tpu_custom_call.1} parent=1 // pred_fallthru
      _
    // Predicated region
    $region10: #{tpu_custom_call.1} parent=1 // pred_check
      _
    $region11: #{tpu_custom_call.1} parent=1 // pred_check_branch
      %43 = sbr.rel (0) target = $region13
    $region12: #{tpu_custom_call.1} parent=1 // pred_region
      _
    $region13: #{tpu_custom_call.1} parent=1 // pred_fallthru
      _
    // Predicated region
    $region14: #{tpu_custom_call.1} parent=1 // pred_check
      _
    $region15: #{tpu_custom_call.1} parent=1 // pred_check_branch
      %45 = sbr.rel (0) target = $region17
    $region16: #{tpu_custom_call.1} parent=1 // pred_region
      _
    $region17: #{tpu_custom_call.1} parent=1 // pred_fallthru
      _
    // Predicated region
    $region18: #{tpu_custom_call.1} parent=1 // pred_check
      _
    $region19: #{tpu_custom_call.1} parent=1 // pred_check_branch
      %47 = sbr.rel (0) target = $region21
    $region20: #{tpu_custom_call.1} parent=1 // pred_region
      %49 = vsyncadd [#allocation6], 0
      %s50 = sshll.u32 %s4, 4
      %s51 = int_to_ptr.hbm [resolvable:$true] %s50
      %s52 = sshll.u32 [#allocation7], 4
      %s53 = int_to_ptr.vmem [resolvable:$true] %s52
      %58 = dma.hbm_to_vmem [thread:$0]  %s51, 512, %s53, [#allocation6], 128, 128, 8
    $region21: #{tpu_custom_call.1} parent=1 // pred_fallthru
      _
    // Predicated region
    $region22: #{tpu_custom_call.1} parent=1 // pred_check
      _
    $region23: #{tpu_custom_call.1} parent=1 // pred_check_branch
      %60 = sbr.rel (0) target = $region25
    $region24: #{tpu_custom_call.1} parent=1 // pred_region
      _
    $region25: #{tpu_custom_call.1} parent=1 // pred_fallthru
      _
    // Predicated region
    $region26: #{tpu_custom_call.1} parent=1 // pred_check
      _
    $region27: #{tpu_custom_call.1} parent=1 // pred_check_branch
      %62 = sbr.rel (0) target = $region29
    $region28: #{tpu_custom_call.1} parent=1 // pred_region
      _
    $region29: #{tpu_custom_call.1} parent=1 // pred_fallthru
      _
    // Predicated region
    $region30: #{tpu_custom_call.1} parent=1 // pred_check
      _
    $region31: #{tpu_custom_call.1} parent=1 // pred_check_branch
      %64 = sbr.rel (0) target = $region33
    $region32: #{tpu_custom_call.1} parent=1 // pred_region
      _
    $region33: #{tpu_custom_call.1} parent=1 // pred_fallthru
      _
    // Predicated region
    $region34: #{tpu_custom_call.1} parent=1 // pred_check
      _
    $region35: #{tpu_custom_call.1} parent=1 // pred_check_branch
      %66 = sbr.rel (0) target = $region37
    $region36: #{tpu_custom_call.1} parent=1 // pred_region
      %68 = dma.done [#allocation4], 1024
    $region37: #{tpu_custom_call.1} parent=1 // pred_fallthru
      _
    // Predicated region
    $region38: #{tpu_custom_call.1} parent=1 // pred_check
      _
    $region39: #{tpu_custom_call.1} parent=1 // pred_check_branch
      %70 = sbr.rel (0) target = $region41
    $region40: #{tpu_custom_call.1} parent=1 // pred_region
      %72 = dma.done [#allocation6], 512
    $region41: #{tpu_custom_call.1} parent=1 // pred_fallthru
      _
    // Predicated region
    $region42: #{tpu_custom_call.1} parent=1 // pred_check
      _
    $region43: #{tpu_custom_call.1} parent=1 // pred_check_branch
      %74 = sbr.rel (0) target = $region45
    $region44: #{tpu_custom_call.1} parent=1 // pred_region
      %76 = dma.done [#allocation6], 512
    $region45: #{tpu_custom_call.1} parent=1 // pred_fallthru
      _
    %v77 = vld [vmem:[#allocation3] sm:$0xff]
    %v78 = vld [vmem:[#allocation3 + $0x8] sm:$0xff]
    %v79 = vld [vmem:[#allocation3 + $0x10] sm:$0xff]
    %v80 = vld [vmem:[#allocation3 + $0x18] sm:$0xff]
    %v81 = vld [vmem:[#allocation3 + $0x20] sm:$0xff]
    %v82 = vld [vmem:[#allocation3 + $0x28] sm:$0xff]
    %v83 = vld [vmem:[#allocation3 + $0x30] sm:$0xff]
    %v84 = vld [vmem:[#allocation3 + $0x38] sm:$0xff]
    %v85 = vld [vmem:[#allocation5] sm:$0xff]
    %v86 = vld [vmem:[#allocation5 + $0x8] sm:$0xff]
    %v87 = vld [vmem:[#allocation5 + $0x10] sm:$0xff]
    %v88 = vld [vmem:[#allocation5 + $0x18] sm:$0xff]
    %v89 = vld [vmem:[%s2] sm:$0x1]
    %v91 = vperm.slane %v89, 0
    %vm93 = vcmask 261120
    %v95 = vsel %vm93, %v77, 0
    %v98 = vsel %vm93, %v78, 0
    %v101 = vsel %vm93, %v79, 0
    %v104 = vsel %vm93, %v80, 0
    %v107 = vsel %vm93, %v81, 0
    %v110 = vsel %vm93, %v82, 0
    %v113 = vsel %vm93, %v83, 0
    %v116 = vsel %vm93, %v84, 0
    %118 = vmatpush.msra.mxu0 0.0
    %119 = vmatpush.msra.mxu0 0.0
    %120 = vmatpush.msra.mxu0 0.0
    %121 = vmatpush.msra.mxu0 0.0
    %122 = vmatpush.msra.mxu0 0.0
    %123 = vmatpush.msra.mxu0 0.0
    %124 = vmatpush.msra.mxu0 0.0
    %125 = vmatpush.msra.mxu0 0.0
    %126 = vmatpush.msra.mxu0 0.0
    %127 = vmatpush.msra.mxu0 0.0
    %128 = vmatpush.msra.mxu0 0.0
    %129 = vmatpush.msra.mxu0 0.0
    %130 = vmatpush.msra.mxu0 %v88
    %131 = vmatpush.msra.mxu0 %v87
    %132 = vmatpush.msra.mxu0 %v86
    %133 = vmatpush.msra.mxu0 %v85
    %134 = vmatmul.f32.gmra.mxu0 %v95
    %v135 = vpop.f32.mrf.mxu0
    %v136 = vadd.f32 %v91, %v135
    %137 = vmatmul.f32.gmra.mxu0 %v98
    %v138 = vpop.f32.mrf.mxu0
    %v139 = vadd.f32 %v91, %v138
    %140 = vmatmul.f32.gmra.mxu0 %v101
    %v141 = vpop.f32.mrf.mxu0
    %v142 = vadd.f32 %v91, %v141
    %143 = vmatmul.f32.gmra.mxu0 %v104
    %v144 = vpop.f32.mrf.mxu0
    %v145 = vadd.f32 %v91, %v144
    %146 = vmatmul.f32.gmra.mxu0 %v107
    %v147 = vpop.f32.mrf.mxu0
    %v148 = vadd.f32 %v91, %v147
    %149 = vmatmul.f32.gmra.mxu0 %v110
    %v150 = vpop.f32.mrf.mxu0
    %v151 = vadd.f32 %v91, %v150
    %152 = vmatmul.f32.gmra.mxu0 %v113
    %v153 = vpop.f32.mrf.mxu0
    %v154 = vadd.f32 %v91, %v153
    %155 = vmatmul.f32.gmra.mxu0 %v116
    %v156 = vpop.f32.mrf.mxu0
    %v157 = vadd.f32 %v91, %v156
    %158 = vdwg.mxu0
    %v159 = vmax.f32 %v136, 0.0
    %v160 = vmax.f32 %v139, 0.0
    %v161 = vmax.f32 %v142, 0.0
    %v162 = vmax.f32 %v145, 0.0
    %v163 = vmax.f32 %v148, 0.0
    %v164 = vmax.f32 %v151, 0.0
    %v165 = vmax.f32 %v154, 0.0
    %v166 = vmax.f32 %v157, 0.0
    %v167 = vld [vmem:[%s3] sm:$0x1]
    %v169 = vperm.slane %v167, 0
    %v171 = vmul.f32 %v159, %v169
    %v172 = vmul.f32 %v160, %v169
    %v173 = vmul.f32 %v161, %v169
    %v174 = vmul.f32 %v162, %v169
    %v175 = vmul.f32 %v163, %v169
    %v176 = vmul.f32 %v164, %v169
    %v177 = vmul.f32 %v165, %v169
    %v178 = vmul.f32 %v166, %v169
    %179 = vadd.xlane.f32.xlu0 %v171
    %v180 = vpop.xlane.xlu0 %179
    %181 = vadd.xlane.f32.xlu0 %v172
    %v182 = vpop.xlane.xlu0 %181
    %183 = vadd.xlane.f32.xlu0 %v173
    %v184 = vpop.xlane.xlu0 %183
    %185 = vadd.xlane.f32.xlu0 %v174
    %v186 = vpop.xlane.xlu0 %185
    %187 = vadd.xlane.f32.xlu0 %v175
    %v188 = vpop.xlane.xlu0 %187
    %189 = vadd.xlane.f32.xlu0 %v176
    %v190 = vpop.xlane.xlu0 %189
    %191 = vadd.xlane.f32.xlu0 %v177
    %v192 = vpop.xlane.xlu0 %191
    %193 = vadd.xlane.f32.xlu0 %v178
    %v194 = vpop.xlane.xlu0 %193
    %v195 = vlaneseq
    %v196 = vand.u32 %v195, 127
    %vm197 = vcmp.lt.s32.totalorder %v196, 5
    %v206 = vperm.slane %v180, %v196
    %v207 = vperm.slane %v182, %v196
    %v208 = vperm.slane %v184, %v196
    %v209 = vperm.slane %v186, %v196
    %v210 = vperm.slane %v188, %v196
    %v211 = vperm.slane %v190, %v196
    %v212 = vperm.slane %v192, %v196
    %v213 = vperm.slane %v194, %v196
    %vm214 = vcmask 1041409
    %v215 = vsel %vm214, %v207, %v206
    %vm216 = vcmask 1042434
    %v217 = vsel %vm216, %v208, %v215
    %vm218 = vcmask 1043459
    %v219 = vsel %vm218, %v209, %v217
    %vm220 = vcmask 1044484
    %v221 = vsel %vm220, %v210, %v219
    %vm222 = vcmask 1045509
    %v223 = vsel %vm222, %v211, %v221
    %vm224 = vcmask 1046534
    %v225 = vsel %vm224, %v212, %v223
    %vm226 = vcmask 1047559
    %v227 = vsel %vm226, %v213, %v225
    %v229 = vsel %vm197, %v227, -inf
    %vm230 = vcmask 64512
    %v231 = vsel %vm230, %v229, -inf
    %232 = vmax.xlane.f32.xlu0 %v231
    %v233 = vpop.xlane.xlu0 %232
    %v234 = vsub.f32 %v229, %v233
    %v235 = vmul.f32 %v234, 1.442695
    %v236 = vpow.pop %v235
    %v237 = vsel %vm230, %v236, 0.0
    %238 = vadd.xlane.f32.xlu0 %v237
    %v239 = vpop.xlane.xlu0 %238
    %v240 = vrcp.pop %v239
    %v241 = vmul.f32 %v239, %v240
    %v242 = vsub.f32 1.0, %v241
    %v243 = vmul.f32 %v240, %v242
    %v244 = vadd.f32 %v240, %v243
    %vm245 = vweird.f32 %v239
    %vm246 = vweird.f32 %v240
    %vm247 = vmor %vm245, %vm246
    %v248 = vsel %vm247, %v240, %v244
    %v249 = vand.u32 2147483647, %v239
    %vm250 = vcmp.eq.f32.partialorder %v249, 8.507059e+37
    %v251 = vand.u32 %v239, 2147483648
    %v252 = vor.u32 1.1754944e-38, %v251
    %v253 = vsel %vm250, %v252, %v248
    %v254 = vmul.f32 1.0, %v253
    %v255 = vperm.slane %v236, 0
    %v256 = vlaneseq
    %v257 = vshrl.u32 %v256, 7
    %259 = vset.pattern.permute.xlu0 %v257
    %260 = vperm.xlu0 %259, %v255
    %v261 = vpop.permute.xlu0 %260
    %v262 = vperm.slane %v236, 1
    %v263 = vlaneseq
    %v264 = vshrl.u32 %v263, 7
    %266 = vset.pattern.permute.xlu0 %v264
    %267 = vperm.xlu0 %266, %v262
    %v268 = vpop.permute.xlu0 %267
    %v269 = vperm.slane %v236, 2
    %v270 = vlaneseq
    %v271 = vshrl.u32 %v270, 7
    %273 = vset.pattern.permute.xlu0 %v271
    %274 = vperm.xlu0 %273, %v269
    %v275 = vpop.permute.xlu0 %274
    %v276 = vperm.slane %v236, 3
    %v277 = vlaneseq
    %v278 = vshrl.u32 %v277, 7
    %280 = vset.pattern.permute.xlu0 %v278
    %281 = vperm.xlu0 %280, %v276
    %v282 = vpop.permute.xlu0 %281
    %v283 = vperm.slane %v236, 4
    %v284 = vlaneseq
    %v285 = vshrl.u32 %v284, 7
    %287 = vset.pattern.permute.xlu0 %v285
    %288 = vperm.xlu0 %287, %v283
    %v289 = vpop.permute.xlu0 %288
    %v290 = vperm.slane %v236, 5
    %v291 = vlaneseq
    %v292 = vshrl.u32 %v291, 7
    %294 = vset.pattern.permute.xlu0 %v292
    %295 = vperm.xlu0 %294, %v290
    %v296 = vpop.permute.xlu0 %295
    %v297 = vperm.slane %v236, 6
    %v298 = vlaneseq
    %v299 = vshrl.u32 %v298, 7
    %301 = vset.pattern.permute.xlu0 %v299
    %302 = vperm.xlu0 %301, %v297
    %v303 = vpop.permute.xlu0 %302
    %v304 = vperm.slane %v236, 7
    %v305 = vlaneseq
    %v306 = vshrl.u32 %v305, 7
    %308 = vset.pattern.permute.xlu0 %v306
    %309 = vperm.xlu0 %308, %v304
    %v310 = vpop.permute.xlu0 %309
    %v311 = vmul.f32 %v77, %v261
    %v312 = vmul.f32 %v78, %v268
    %v313 = vmul.f32 %v79, %v275
    %v314 = vmul.f32 %v80, %v282
    %v315 = vmul.f32 %v81, %v289
    %v316 = vmul.f32 %v82, %v296
    %v317 = vmul.f32 %v83, %v303
    %v318 = vmul.f32 %v84, %v310
    %v319 = vsel %vm93, %v311, 0.0
    %v320 = vrot.slane %v319, 4
    %v321 = vadd.f32 %v319, %v320
    %v322 = vrot.slane %v321, 2
    %v323 = vadd.f32 %v321, %v322
    %v324 = vrot.slane %v323, 1
    %v325 = vadd.f32 %v323, %v324
    %v326 = vsel %vm93, %v312, 0.0
    %v327 = vrot.slane %v326, 4
    %v328 = vadd.f32 %v326, %v327
    %v329 = vrot.slane %v328, 2
    %v330 = vadd.f32 %v328, %v329
    %v331 = vrot.slane %v330, 1
    %v332 = vadd.f32 %v330, %v331
    %v333 = vsel %vm93, %v313, 0.0
    %v334 = vrot.slane %v333, 4
    %v335 = vadd.f32 %v333, %v334
    %v336 = vrot.slane %v335, 2
    %v337 = vadd.f32 %v335, %v336
    %v338 = vrot.slane %v337, 1
    %v339 = vadd.f32 %v337, %v338
    %v340 = vsel %vm93, %v314, 0.0
    %v341 = vrot.slane %v340, 4
    %v342 = vadd.f32 %v340, %v341
    %v343 = vrot.slane %v342, 2
    %v344 = vadd.f32 %v342, %v343
    %v345 = vrot.slane %v344, 1
    %v346 = vadd.f32 %v344, %v345
    %v347 = vsel %vm93, %v315, 0.0
    %v348 = vrot.slane %v347, 4
    %v349 = vadd.f32 %v347, %v348
    %v350 = vrot.slane %v349, 2
    %v351 = vadd.f32 %v349, %v350
    %v352 = vrot.slane %v351, 1
    %v353 = vadd.f32 %v351, %v352
    %v354 = vsel %vm93, %v316, 0.0
    %v355 = vrot.slane %v354, 4
    %v356 = vadd.f32 %v354, %v355
    %v357 = vrot.slane %v356, 2
    %v358 = vadd.f32 %v356, %v357
    %v359 = vrot.slane %v358, 1
    %v360 = vadd.f32 %v358, %v359
    %v361 = vsel %vm93, %v317, 0.0
    %v362 = vrot.slane %v361, 4
    %v363 = vadd.f32 %v361, %v362
    %v364 = vrot.slane %v363, 2
    %v365 = vadd.f32 %v363, %v364
    %v366 = vrot.slane %v365, 1
    %v367 = vadd.f32 %v365, %v366
    %v368 = vsel %vm93, %v318, 0.0
    %v369 = vrot.slane %v368, 4
    %v370 = vadd.f32 %v368, %v369
    %v371 = vrot.slane %v370, 2
    %v372 = vadd.f32 %v370, %v371
    %v373 = vrot.slane %v372, 1
    %v374 = vadd.f32 %v372, %v373
    %v376 = vrot.slane %v254, 1
    %v377 = vrot.slane %v254, 2
    %v378 = vrot.slane %v254, 3
    %v379 = vrot.slane %v254, 4
    %v380 = vrot.slane %v254, 5
    %v381 = vrot.slane %v254, 6
    %v382 = vrot.slane %v254, 7
    %v391 = vmul.f32 %v325, %v254
    %v392 = vmul.f32 %v332, %v376
    %v393 = vmul.f32 %v339, %v377
    %v394 = vmul.f32 %v346, %v378
    %v395 = vmul.f32 %v353, %v379
    %v396 = vmul.f32 %v360, %v380
    %v397 = vmul.f32 %v367, %v381
    %v398 = vmul.f32 %v374, %v382
    %v399 = vld [vmem:[#allocation7] sm:$0xff]
    %v400 = vld [vmem:[#allocation7 + $0x8] sm:$0xff]
    %v401 = vld [vmem:[#allocation7 + $0x10] sm:$0xff]
    %v402 = vld [vmem:[#allocation7 + $0x18] sm:$0xff]
    %v403 = vld [vmem:[%s5] sm:$0x1]
    %v405 = vperm.slane %v403, 0
    %v415 = vrot.slane %v392, 7
    %v416 = vsel %vm214, %v415, %v391
    %v417 = vrot.slane %v393, 6
    %v418 = vsel %vm216, %v417, %v416
    %v419 = vrot.slane %v394, 5
    %v420 = vsel %vm218, %v419, %v418
    %v421 = vrot.slane %v395, 4
    %v422 = vsel %vm220, %v421, %v420
    %v423 = vrot.slane %v396, 3
    %v424 = vsel %vm222, %v423, %v422
    %v425 = vrot.slane %v397, 2
    %v426 = vsel %vm224, %v425, %v424
    %v427 = vrot.slane %v398, 1
    %v428 = vsel %vm226, %v427, %v426
    %v429 = vsel %vm93, %v428, 0
    %431 = vmatpush.msra.mxu0 0.0
    %432 = vmatpush.msra.mxu0 0.0
    %433 = vmatpush.msra.mxu0 0.0
    %434 = vmatpush.msra.mxu0 0.0
    %435 = vmatpush.msra.mxu0 0.0
    %436 = vmatpush.msra.mxu0 0.0
    %437 = vmatpush.msra.mxu0 0.0
    %438 = vmatpush.msra.mxu0 0.0
    %439 = vmatpush.msra.mxu0 0.0
    %440 = vmatpush.msra.mxu0 0.0
    %441 = vmatpush.msra.mxu0 0.0
    %442 = vmatpush.msra.mxu0 0.0
    %443 = vmatpush.msra.mxu0 %v402
    %444 = vmatpush.msra.mxu0 %v401
    %445 = vmatpush.msra.mxu0 %v400
    %446 = vmatpush.msra.mxu0 %v399
    %447 = vmatmul.f32.gmra.mxu0 %v429
    %v448 = vpop.f32.mrf.mxu0
    %v449 = vadd.f32 %v405, %v448
    %450 = vdwg.mxu0
    %v451 = vmax.f32 %v449, 0.0
    %v452 = vld [vmem:[%s6] sm:$0x1]
    %v454 = vperm.slane %v452, 0
    %v456 = vmul.f32 %v451, %v454
    %457 = vadd.xlane.f32.xlu0 %v456
    %v458 = vpop.xlane.xlu0 %457
    %s459 = sld [smem:[#allocation2]]
    %v460 = vstv %s459
    %v461 = vadd.f32 %v458, %v460
    %vm462 = vcmask 7168
    %463 = vst.msk [vmem:[%s8] sm:$0xff] %vm462, %v461
    // Predicated region
    $region46: #{tpu_custom_call.1} parent=1 // pred_check
      _
    $region47: #{tpu_custom_call.1} parent=1 // pred_check_branch
      %465 = sbr.rel (0) target = $region49
    $region48: #{tpu_custom_call.1} parent=1 // pred_region
      _
    $region49: #{tpu_custom_call.1} parent=1 // pred_fallthru
      _
    // Predicated region
    $region50: #{tpu_custom_call.1} parent=1 // pred_check
      _
    $region51: #{tpu_custom_call.1} parent=1 // pred_check_branch
      %467 = sbr.rel (0) target = $region53
    $region52: #{tpu_custom_call.1} parent=1 // pred_region
      _
    $region53: #{tpu_custom_call.1} parent=1 // pred_fallthru
      _
    %468 = vsyncpa [#allocation4], 1
    %469 = vsyncpa [#allocation6], 1

</llo_original>
